<compile_context>
chip_gen: v6e
topology: v6e:2x2x1
jax: 0.10.0
libtpu: 0.0.40
codegen_flags: <defaults>
</compile_context>

<pallas_src>
import math
import jax
import jax.numpy as jnp
from jax import lax
from jax.experimental import pallas as pl
from jax.experimental.pallas import tpu as pltpu


def fm_kernel(b_ref, x_ref, u_ref, vxT_ref, vuT_ref, o_ref):
    # b_ref   : (1, 1)          f32 SMEM  -- linear bias
    # x_ref   : (TILE_B, x_dim) VMEM      -- batch tile of x (native dtype)
    # u_ref   : (TILE_B, u_dim) VMEM      -- batch tile of u (native dtype)
    # vxT_ref : (F+1, x_dim)    f32 VMEM  -- [V | w^T]^T rows for x features (resident)
    # vuT_ref : (F+1, u_dim)    f32 VMEM  -- [V | w^T]^T rows for u features (resident)
    # o_ref   : (1, 1, TILE_B)  f32 VMEM  -- scores, lane-dense (batch on lanes)
    x = x_ref[...].astype(jnp.float32)   # no-op for f32 inputs; VPU widen for bf16
    u = u_ref[...].astype(jnp.float32)

    # zvT[f, b] = sum_d V'[d, f] * z[b, d]; computed as A @ B^T on the MXU so
    # the big batch dim lands on lanes (MXU output is (F+1, TILE_B)).
    dn = (((1,), (1,)), ((), ()))
    zvT = lax.dot_general(vxT_ref[...], x, dn, preferred_element_type=jnp.float32)
    zvT = zvT + lax.dot_general(vuT_ref[...], u, dn,
                                preferred_element_type=jnp.float32)

    nf = zvT.shape[0] - 1                               # number of real factor rows
    zf = zvT[:nf, :]                                    # (F, TILE_B) factor projections
    inter = jnp.sum(zf * zf, axis=0, keepdims=True)     # (1, TILE_B)  XLU reduce
    lin = zvT[nf:nf + 1, :] + b_ref[0, 0]               # (1, TILE_B)

    o_ref[0] = (lin + inter).astype(o_ref.dtype)


def _round_up(x, m):
    return -(-x // m) * m


def _round_down(x, m):
    return (x // m) * m


def _vmem_budget():
    """(vmem_limit_bytes, streamed_tile_budget_bytes) for the current device."""
    phys = 64 * 1024 * 1024                       # conservative fallback (v7x per-TC)
    try:
        phys = int(pltpu.get_tpu_info().vmem_capacity_bytes)
    except Exception:
        pass
    # 32 MiB scoped on v7x (64 MiB physical), 64 MiB on v5e/v6e (128 MiB physical).
    vmem_limit = min(phys // 2, 64 * 1024 * 1024)
    # Half the limit for the double-buffered streamed x+u tiles; the rest is
    # headroom for MXU-output intermediates, output double buffers, the
    # resident factor matrix and any in-kernel dtype widening.
    streamed_budget = vmem_limit // 2
    return vmem_limit, streamed_budget


def _pick_tile_b(B, x_dim, u_dim, streamed_budget_bytes):
    """Batch tile sized from lane-padded VMEM footprint (minor dims pad to 128
    lanes, f32, x2 for double buffering), capped so large batches still get
    >= 2 grid steps (keeps both v7x TensorCores fed)."""
    row_bytes = 2 * 4 * (_round_up(max(x_dim, 1), 128) +
                         _round_up(max(u_dim, 1), 128))   # double-buffered bytes/row
    t = max(8, streamed_budget_bytes // row_bytes)
    if B >= 2048:
        t = min(t, max(256, _round_down(-(-B // 2), 256)))  # >= 2 grid steps
    t = min(t, max(8, _round_down(B, 8)))                    # never exceed the batch
    if t >= 256:
        t = _round_down(t, 256)          # full MXU passes + lane-dense stores
    else:
        t = max(8, _round_down(t, 8))
    return t


def fm_forward(x, u, w, b, V, *, tile_b=None):
    """x: (B, x_dim), u: (B, u_dim), w: (1, D), b: (1,), V: (D, F) -> (B, 1) f32."""
    B, x_dim = x.shape
    _, u_dim = u.shape
    D = x_dim + u_dim
    F = V.shape[1]

    vmem_limit, streamed_budget = _vmem_budget()

    # Fuse the linear weight into the factor matrix: V' = [V | w^T]  (D, F+1),
    # pre-transpose and split per input (tiny parameter-side glue, stays f32).
    Vp = jnp.concatenate([V.astype(jnp.float32),
                          jnp.transpose(w).astype(jnp.float32)], axis=1)  # (D, F+1)
    VpT = jnp.transpose(Vp)                                               # (F+1, D)
    VxT = VpT[:, :x_dim]                                                  # (F+1, x_dim)
    VuT = VpT[:, x_dim:]                                                  # (F+1, u_dim)

    if tile_b is None:
        tile_b = _pick_tile_b(B, x_dim, u_dim, streamed_budget)
    tile_b = max(8, ((int(tile_b) + 7) // 8) * 8)

    # Only pad when a single tile is larger than the whole batch (tiny B or a
    # user-forced oversized tile); the normal path streams x/u as-is and the
    # ragged last tile is a Pallas partial edge block whose garbage tail rows
    # are dropped by the final [:B] slice.
    if B < tile_b:
        pad = tile_b - B
        x = jnp.pad(x, ((0, pad), (0, 0)))
        u = jnp.pad(u, ((0, pad), (0, 0)))
    Bk = x.shape[0]

    num_tiles = pl.cdiv(Bk, tile_b)
    b_smem = b.reshape(1, 1).astype(jnp.float32)

    flops = 2 * B * D * (F + 1) + 3 * B * (F + 1)
    bytes_accessed = (B * x_dim * x.dtype.itemsize + B * u_dim * u.dtype.itemsize
                      + B * 4 + D * (F + 1) * 4 + 4)

    out_t = pl.pallas_call(
        fm_kernel,
        out_shape=jax.ShapeDtypeStruct((num_tiles, 1, tile_b), jnp.float32),
        grid=(num_tiles,),
        in_specs=[
            pl.BlockSpec(memory_space=pltpu.SMEM),                 # bias scalar
            pl.BlockSpec((tile_b, x_dim), lambda i: (i, 0)),       # x tile (streamed)
            pl.BlockSpec((tile_b, u_dim), lambda i: (i, 0)),       # u tile (streamed)
            pl.BlockSpec((F + 1, x_dim), lambda i: (0, 0)),        # VxT (resident)
            pl.BlockSpec((F + 1, u_dim), lambda i: (0, 0)),        # VuT (resident)
        ],
        out_specs=pl.BlockSpec((1, 1, tile_b), lambda i: (i, 0, 0)),
        compiler_params=pltpu.CompilerParams(
            dimension_semantics=("parallel",),
            vmem_limit_bytes=vmem_limit,
        ),
        cost_estimate=pl.CostEstimate(
            flops=flops, transcendentals=0, bytes_accessed=bytes_accessed),
    )(b_smem, x, u, VxT, VuT)

    # (num_tiles, 1, tile_b) -> (num_tiles*tile_b, 1) -> drop padded/garbage tail.
    return out_t.reshape(num_tiles * tile_b, 1)[:B]


def fm_reference(x, u, w, b, V):
    z = jnp.concatenate([x, u], axis=1).astype(jnp.float32)
    lin = z @ jnp.transpose(w).astype(jnp.float32) + b.astype(jnp.float32)
    zv = z @ V.astype(jnp.float32)
    inter = jnp.sum(zv * zv, axis=1, keepdims=True)
    return lin + inter


if __name__ == "__main__":
    # Small shapes consistent with the module; B deliberately not a multiple of
    # 8 or of the tile sizes so the partial-edge-block path is exercised.
    B, x_dim, u_dim, num_factors = 20, 16, 16, 8
    D = x_dim + u_dim

    key = jax.random.PRNGKey(0)
    kx, ku, kw, kb, kv = jax.random.split(key, 5)

    # Parameter init mirroring nn.Linear / nn.init.uniform_.
    bound = 1.0 / math.sqrt(D)
    w = jax.random.uniform(kw, (1, D), jnp.float32, -bound, bound)   # linear.weight
    b = jax.random.uniform(kb, (1,), jnp.float32, -bound, bound)     # linear.bias
    V = jax.random.uniform(kv, (D, num_factors), jnp.float32, -bound, bound)

    x = jax.random.normal(kx, (B, x_dim), jnp.float32)
    u = jax.random.normal(ku, (B, u_dim), jnp.float32)

    ref = fm_reference(x, u, w, b, V)

    # Auto tile: no wrapper pad, ragged last tile handled by Pallas edge block.
    out_auto = jax.block_until_ready(fm_forward(x, u, w, b, V))
    assert out_auto.shape == (B, 1)
    assert jnp.allclose(out_auto, ref, atol=1e-4, rtol=1e-4), (out_auto, ref)

    # Forced small tile: multi-tile grid + ragged tail tile.
    out_tiled = jax.block_until_ready(fm_forward(x, u, w, b, V, tile_b=8))
    assert out_tiled.shape == (B, 1)
    assert jnp.allclose(out_tiled, ref, atol=1e-4, rtol=1e-4), (out_tiled, ref)

    # Forced oversized tile (> B): tiny-pad fallback path.
    out_big = jax.block_until_ready(fm_forward(x, u, w, b, V, tile_b=64))
    assert out_big.shape == (B, 1)
    assert jnp.allclose(out_big, ref, atol=1e-4, rtol=1e-4), (out_big, ref)

    # Native-dtype streaming: bf16 activations widen on-chip, not in HBM.
    x16, u16 = x.astype(jnp.bfloat16), u.astype(jnp.bfloat16)
    out_bf16 = jax.block_until_ready(fm_forward(x16, u16, w, b, V))
    ref_bf16 = fm_reference(x16, u16, w, b, V)
    assert jnp.allclose(out_bf16, ref_bf16, atol=1e-2, rtol=1e-2), (out_bf16, ref_bf16)

    print("KERNEL_OK")
</pallas_src>

<mosaic_0001>
module attributes {stable_mosaic.version = 11 : i64} {
  func.func @fm_kernel(%arg0: i32, %arg1: memref<1x1xf32, #tpu.memory_space<smem>>, %arg2: memref<16x16xf32, #tpu.memory_space<vmem>>, %arg3: memref<16x16xf32, #tpu.memory_space<vmem>>, %arg4: memref<9x16xf32, #tpu.memory_space<vmem>>, %arg5: memref<9x16xf32, #tpu.memory_space<vmem>>, %arg6: memref<1x1x16xf32, #tpu.memory_space<vmem>>) attributes {dimension_semantics = [#tpu.dimension_semantics<parallel>], iteration_bounds = array<i64: 2>, scalar_prefetch = 0 : i64, scratch_operands = 0 : i64, tpu.core_type = #tpu.core_type<tc>, window_params = [{transform_indices = @transform_0, window_bounds = array<i64: 1, 1>}, {transform_indices = @transform_1, window_bounds = array<i64: 16, 16>}, {transform_indices = @transform_2, window_bounds = array<i64: 16, 16>}, {pipeline_mode = #tpu.pipeline_mode<synchronous>, transform_indices = @transform_3, window_bounds = array<i64: 9, 16>}, {pipeline_mode = #tpu.pipeline_mode<synchronous>, transform_indices = @transform_4, window_bounds = array<i64: 9, 16>}, {transform_indices = @transform_5, window_bounds = array<i64: 1, 1, 16>}]} {
    %c0 = arith.constant 0 : index
    %c0_0 = arith.constant 0 : index
    %0 = vector.load %arg2[%c0, %c0_0] : memref<16x16xf32, #tpu.memory_space<vmem>>, vector<16x16xf32>
    %c0_1 = arith.constant 0 : index
    %c0_2 = arith.constant 0 : index
    %1 = vector.load %arg3[%c0_1, %c0_2] : memref<16x16xf32, #tpu.memory_space<vmem>>, vector<16x16xf32>
    %c0_3 = arith.constant 0 : index
    %c0_4 = arith.constant 0 : index
    %2 = vector.load %arg4[%c0_3, %c0_4] : memref<9x16xf32, #tpu.memory_space<vmem>>, vector<9x16xf32>
    %cst = arith.constant dense<0.000000e+00> : vector<9x16xf32>
    %3 = tpu.matmul %2, %0, %cst {dimension_numbers = #tpu.dot_dimension_numbers<[1], [1], [0], [0], [0, 0, 1, 0], [], []>} : vector<9x16xf32>, vector<16x16xf32>, vector<9x16xf32> -> vector<9x16xf32>
    %c0_5 = arith.constant 0 : index
    %c0_6 = arith.constant 0 : index
    %4 = vector.load %arg5[%c0_5, %c0_6] : memref<9x16xf32, #tpu.memory_space<vmem>>, vector<9x16xf32>
    %cst_7 = arith.constant dense<0.000000e+00> : vector<9x16xf32>
    %5 = tpu.matmul %4, %1, %cst_7 {dimension_numbers = #tpu.dot_dimension_numbers<[1], [1], [0], [0], [0, 0, 1, 0], [], []>} : vector<9x16xf32>, vector<16x16xf32>, vector<9x16xf32> -> vector<9x16xf32>
    %6 = arith.addf %3, %5 : vector<9x16xf32>
    %7 = vector.extract_strided_slice %6 {offsets = [0, 0], sizes = [8, 16], strides = [1, 1]} : vector<9x16xf32> to vector<8x16xf32>
    %8 = arith.mulf %7, %7 : vector<8x16xf32>
    %cst_8 = arith.constant dense<0.000000e+00> : vector<16xf32>
    %9 = vector.multi_reduction <add>, %8, %cst_8 [0] : vector<8x16xf32> to vector<16xf32>
    %10 = vector.shape_cast %9 : vector<16xf32> to vector<1x16xf32>
    %11 = vector.extract_strided_slice %6 {offsets = [8, 0], sizes = [1, 16], strides = [1, 1]} : vector<9x16xf32> to vector<1x16xf32>
    %c0_9 = arith.constant 0 : index
    %c0_10 = arith.constant 0 : index
    %12 = memref.load %arg1[%c0_9, %c0_10] : memref<1x1xf32, #tpu.memory_space<smem>>
    %13 = vector.broadcast %12 : f32 to vector<1x16xf32>
    %14 = arith.addf %11, %13 : vector<1x16xf32>
    %15 = arith.addf %14, %10 : vector<1x16xf32>
    %c0_11 = arith.constant 0 : index
    %c0_12 = arith.constant 0 : index
    %c0_13 = arith.constant 0 : index
    %16 = vector.load %arg6[%c0_11, %c0_12, %c0_13] : memref<1x1x16xf32, #tpu.memory_space<vmem>>, vector<1x1x16xf32>
    %17 = vector.shape_cast %16 : vector<1x1x16xf32> to vector<1x16xf32>
    %18 = vector.shape_cast %15 : vector<1x16xf32> to vector<1x1x16xf32>
    tpu.vector_store %arg6[%c0_11, %c0_12, %c0_13], %18 {strides = array<i32>} : memref<1x1x16xf32, #tpu.memory_space<vmem>>, vector<1x1x16xf32>,
    return
  }
  func.func @transform_0(%arg0: i32) -> (i32, i32) {
    %c0_i32 = arith.constant 0 : i32
    %c0_i32_0 = arith.constant 0 : i32
    %c0_i32_1 = arith.constant 0 : i32
    return %c0_i32, %c0_i32_0 : i32, i32
  }
  func.func @transform_1(%arg0: i32) -> (i32, i32) {
    %c0_i32 = arith.constant 0 : i32
    %c0_i32_0 = arith.constant 0 : i32
    return %arg0, %c0_i32 : i32, i32
  }
  func.func @transform_2(%arg0: i32) -> (i32, i32) {
    %c0_i32 = arith.constant 0 : i32
    %c0_i32_0 = arith.constant 0 : i32
    return %arg0, %c0_i32 : i32, i32
  }
  func.func @transform_3(%arg0: i32) -> (i32, i32) {
    %c0_i32 = arith.constant 0 : i32
    %c0_i32_0 = arith.constant 0 : i32
    %c0_i32_1 = arith.constant 0 : i32
    return %c0_i32, %c0_i32_0 : i32, i32
  }
  func.func @transform_4(%arg0: i32) -> (i32, i32) {
    %c0_i32 = arith.constant 0 : i32
    %c0_i32_0 = arith.constant 0 : i32
    %c0_i32_1 = arith.constant 0 : i32
    return %c0_i32, %c0_i32_0 : i32, i32
  }
  func.func @transform_5(%arg0: i32) -> (i32, i32, i32) {
    %c0_i32 = arith.constant 0 : i32
    %c0_i32_0 = arith.constant 0 : i32
    %c0_i32_1 = arith.constant 0 : i32
    return %arg0, %c0_i32, %c0_i32_0 : i32, i32, i32
  }
}

</mosaic_0001>

<llo_original>
// kernel: tpu_custom_call.1
$region0: #{tpu_custom_call.1}
  #allocation0 [shape = 'u32[]', space=smem, size = 0x4, offset = 0x4, fixed_abs, tag = 'smem constant byte address 0x4 - core index']
  #allocation1 [shape = 'u32[144,128]{1,0:T(1,128)}', space=vmem, size = 0x12000, scoped, tag = 'internal scratch']
  #allocation2 [shape = 'f32[1,1]{1,0:T(1,128)S(6)}', space=smem, size = 0x200, scoped, tag = 'scoped memory for tpu_custom_call.1']
  %s0 = inlined_call_operand.<no memory space> [shape: f32[1,1], index: 0, kind: input, shape index: {}]
  %s1 = inlined_call_operand.vmem [shape: f32[20,16], index: 1, kind: input, shape index: {}]
  %s2 = inlined_call_operand.vmem [shape: f32[20,16], index: 2, kind: input, shape index: {}]
  %s3 = inlined_call_operand.vmem [shape: f32[9,16], index: 3, kind: input, shape index: {}]
  %s4 = inlined_call_operand.vmem [shape: f32[9,16], index: 4, kind: input, shape index: {}]
  %s5 = inlined_call_operand.hbm [shape: f32[2,1,16], index: 5, kind: output, shape index: {}]
  %s6 = sld [smem:[#allocation0]]
  $region53: #{tpu_custom_call.1} parent=0
    _
  %s8 = ssub.s32 1, %s6
  %s9 = scalar_select 0, %s8, %s6
  %10 = sst [smem:[#allocation2]] %s0
  $region1: #{tpu_custom_call.1} parent=0
    #allocation3 [shape = 'u8[1024]{0}', space=vmem, size = 0x400, scoped, tag = 'output window, operand 0']
    #allocation4 [shape = 's32[2]{0}', space=sflag, size = 0x8, scoped, tag = 'scoped memory for tpu_custom_call.1']
    %11 = vsyncpa [#allocation4], 0
    %s12 = scalar_lea.sflag [#allocation4], 1
    %13 = vsyncpa %s12, 0
    loop: start=0, step=1, limit=4
    $region2: #{tpu_custom_call.1} parent=1 // loop_pre_header
      _
    $region3: #{tpu_custom_call.1} parent=1 // loop_header
      %s15 = sphi 0, %s19
      %p16 = scmp.ge.s32.totalorder %s15, 4
      %s23 = sphi 0, %s23
      %s25 = sphi 0, %s23
      %s26 = sphi 0, %s25
      %s40 = sphi 0, %s26
      %s46 = sphi 0, %s48
      %s49 = sphi 0, %s46
      %s50 = sphi 0, %s49
      %s66 = sphi 0, %s50
      %s72 = sphi 0, %s74
      %s75 = sphi 0, %s72
      %s76 = sphi 0, %s75
      %s92 = sphi 0, %s76
      %s96 = sphi 0, %s96
      %s98 = sphi 0, %s96
      %s99 = sphi 0, %s98
      %s113 = sphi 0, %s99
      %s117 = sphi 0, %s117
      %s119 = sphi 0, %s117
      %s120 = sphi 0, %s119
      %s134 = sphi 0, %s120
      %s140 = sphi 0, %s142
      %s143 = sphi 0, %s140
      %s144 = sphi 0, %s143
      %s160 = sphi 0, %s144
    $region4: #{tpu_custom_call.1} parent=1 // loop_header_branch
      %18 = sbr.rel (%p16) target = $region8
    $region5: #{tpu_custom_call.1} parent=1 // loop_body
      %s20 = ssub.s32 %s15, 1
      %s21 = ssub.s32 %s15, 2
      %s22 = sadd.s32 %s15, 1
      %s24 = sadd.s32 %s23, 1
      %p27 = scmp.eq.s32.totalorder %s15, 1
      %p28 = scmp.ne.s32.totalorder %s23, %s25
      %p29 = scmp.eq.s32.totalorder %s15, 0
      %p30 = por %p28, %p29
      %p31 = scmp.ne.s32.totalorder %s23, %s25
      %p32 = scmp.eq.s32.totalorder %s20, 1
      %p33 = por %p31, %p32
      %p34 = scmp.ne.s32.totalorder %s25, %s26
      %p35 = scmp.eq.s32.totalorder %s20, 0
      %p36 = por %p34, %p35
      %p37 = scmp.ne.s32.totalorder %s25, %s26
      %p38 = scmp.eq.s32.totalorder %s21, 1
      %p39 = por %p37, %p38
      %p41 = scmp.ne.s32.totalorder %s26, %s40
      %p42 = scmp.eq.s32.totalorder %s21, 0
      %p43 = por %p41, %p42
      %s44 = ssub.s32 %s15, %s22
      %p45 = scmp.eq.s32.totalorder %s44, 0
      %s47 = sadd.s32 %s46, 1
      %s48 = scalar_select %p45, %s46, %s47
      %p51 = pneg %p45
      %p52 = scmp.eq.s32.totalorder %s15, 1
      %p53 = por %p51, %p52
      %p54 = scmp.ne.s32.totalorder %s46, %s49
      %p55 = scmp.eq.s32.totalorder %s15, 0
      %p56 = por %p54, %p55
      %p57 = scmp.ne.s32.totalorder %s46, %s49
      %p58 = scmp.eq.s32.totalorder %s20, 1
      %p59 = por %p57, %p58
      %p60 = scmp.ne.s32.totalorder %s49, %s50
      %p61 = scmp.eq.s32.totalorder %s20, 0
      %p62 = por %p60, %p61
      %p63 = scmp.ne.s32.totalorder %s49, %s50
      %p64 = scmp.eq.s32.totalorder %s21, 1
      %p65 = por %p63, %p64
      %p67 = scmp.ne.s32.totalorder %s50, %s66
      %p68 = scmp.eq.s32.totalorder %s21, 0
      %p69 = por %p67, %p68
      %s70 = ssub.s32 %s15, %s22
      %p71 = scmp.eq.s32.totalorder %s70, 0
      %s73 = sadd.s32 %s72, 1
      %s74 = scalar_select %p71, %s72, %s73
      %p77 = pneg %p71
      %p78 = scmp.eq.s32.totalorder %s15, 1
      %p79 = por %p77, %p78
      %p80 = scmp.ne.s32.totalorder %s72, %s75
      %p81 = scmp.eq.s32.totalorder %s15, 0
      %p82 = por %p80, %p81
      %p83 = scmp.ne.s32.totalorder %s72, %s75
      %p84 = scmp.eq.s32.totalorder %s20, 1
      %p85 = por %p83, %p84
      %p86 = scmp.ne.s32.totalorder %s75, %s76
      %p87 = scmp.eq.s32.totalorder %s20, 0
      %p88 = por %p86, %p87
      %p89 = scmp.ne.s32.totalorder %s75, %s76
      %p90 = scmp.eq.s32.totalorder %s21, 1
      %p91 = por %p89, %p90
      %p93 = scmp.ne.s32.totalorder %s76, %s92
      %p94 = scmp.eq.s32.totalorder %s21, 0
      %p95 = por %p93, %p94
      %s97 = sadd.s32 %s96, 1
      %p100 = scmp.eq.s32.totalorder %s15, 1
      %p101 = scmp.ne.s32.totalorder %s96, %s98
      %p102 = scmp.eq.s32.totalorder %s15, 0
      %p103 = por %p101, %p102
      %p104 = scmp.ne.s32.totalorder %s96, %s98
      %p105 = scmp.eq.s32.totalorder %s20, 1
      %p106 = por %p104, %p105
      %p107 = scmp.ne.s32.totalorder %s98, %s99
      %p108 = scmp.eq.s32.totalorder %s20, 0
      %p109 = por %p107, %p108
      %p110 = scmp.ne.s32.totalorder %s98, %s99
      %p111 = scmp.eq.s32.totalorder %s21, 1
      %p112 = por %p110, %p111
      %p114 = scmp.ne.s32.totalorder %s99, %s113
      %p115 = scmp.eq.s32.totalorder %s21, 0
      %p116 = por %p114, %p115
      %s118 = sadd.s32 %s117, 1
      %p121 = scmp.eq.s32.totalorder %s15, 1
      %p122 = scmp.ne.s32.totalorder %s117, %s119
      %p123 = scmp.eq.s32.totalorder %s15, 0
      %p124 = por %p122, %p123
      %p125 = scmp.ne.s32.totalorder %s117, %s119
      %p126 = scmp.eq.s32.totalorder %s20, 1
      %p127 = por %p125, %p126
      %p128 = scmp.ne.s32.totalorder %s119, %s120
      %p129 = scmp.eq.s32.totalorder %s20, 0
      %p130 = por %p128, %p129
      %p131 = scmp.ne.s32.totalorder %s119, %s120
      %p132 = scmp.eq.s32.totalorder %s21, 1
      %p133 = por %p131, %p132
      %p135 = scmp.ne.s32.totalorder %s120, %s134
      %p136 = scmp.eq.s32.totalorder %s21, 0
      %p137 = por %p135, %p136
      %s138 = ssub.s32 %s15, %s22
      %p139 = scmp.eq.s32.totalorder %s138, 0
      %s141 = sadd.s32 %s140, 1
      %s142 = scalar_select %p139, %s140, %s141
      %p145 = pneg %p139
      %p146 = scmp.eq.s32.totalorder %s15, 1
      %p147 = por %p145, %p146
      %p148 = scmp.ne.s32.totalorder %s140, %s143
      %p149 = scmp.eq.s32.totalorder %s15, 0
      %p150 = por %p148, %p149
      %p151 = scmp.ne.s32.totalorder %s140, %s143
      %p152 = scmp.eq.s32.totalorder %s20, 1
      %p153 = por %p151, %p152
      %p154 = scmp.ne.s32.totalorder %s143, %s144
      %p155 = scmp.eq.s32.totalorder %s20, 0
      %p156 = por %p154, %p155
      %p157 = scmp.ne.s32.totalorder %s143, %s144
      %p158 = scmp.eq.s32.totalorder %s21, 1
      %p159 = por %p157, %p158
      %p161 = scmp.ne.s32.totalorder %s144, %s160
      %p162 = scmp.eq.s32.totalorder %s21, 0
      %p163 = por %p161, %p162
      %p164 = scmp.le.s32.totalorder 1, %s15
      %p165 = scmp.lt.s32.totalorder %s15, 3
      %p166 = pnand %p164, %p165
      %p167 = pneg %p166
      // Predicated region
      $region9: #{tpu_custom_call.1} parent=5 // pred_check
        _
      $region10: #{tpu_custom_call.1} parent=5 // pred_check_branch
        %169 = sbr.rel (%p166) target = $region12
      $region11: #{tpu_custom_call.1} parent=5 // pred_region
        %s170 = ssub.s32 %s15, 1
        // Predicated region
        $region13: #{tpu_custom_call.1} parent=11 // pred_check
          %p171 = pneg %p36
        $region14: #{tpu_custom_call.1} parent=11 // pred_check_branch
          %173 = sbr.rel (%p171) target = $region16
        $region15: #{tpu_custom_call.1} parent=11 // pred_region
          _
        $region16: #{tpu_custom_call.1} parent=11 // pred_fallthru
          _
        // Predicated region
        $region17: #{tpu_custom_call.1} parent=11 // pred_check
          %p174 = pneg %p109
        $region18: #{tpu_custom_call.1} parent=11 // pred_check_branch
          %176 = sbr.rel (%p174) target = $region20
        $region19: #{tpu_custom_call.1} parent=11 // pred_region
          _
        $region20: #{tpu_custom_call.1} parent=11 // pred_fallthru
          _
        // Predicated region
        $region21: #{tpu_custom_call.1} parent=11 // pred_check
          %p177 = pneg %p130
        $region22: #{tpu_custom_call.1} parent=11 // pred_check_branch
          %179 = sbr.rel (%p177) target = $region24
        $region23: #{tpu_custom_call.1} parent=11 // pred_region
          _
        $region24: #{tpu_custom_call.1} parent=11 // pred_fallthru
          _
      $region12: #{tpu_custom_call.1} parent=5 // pred_fallthru
        _
      %p180 = scmp.lt.s32.totalorder %s15, 2
      // Predicated region
      $region25: #{tpu_custom_call.1} parent=5 // pred_check
        %p181 = pneg %p180
      $region26: #{tpu_custom_call.1} parent=5 // pred_check_branch
        %183 = sbr.rel (%p181) target = $region28
      $region27: #{tpu_custom_call.1} parent=5 // pred_region
        // Predicated region
        $region29: #{tpu_custom_call.1} parent=27 // pred_check
          %p184 = pneg %p56
        $region30: #{tpu_custom_call.1} parent=27 // pred_check_branch
          %186 = sbr.rel (%p184) target = $region32
        $region31: #{tpu_custom_call.1} parent=27 // pred_region
          %s187 = smul.u32 2, %s15
          %s188 = ssub.s32 3, %s187
          %p189 = scmp.lt.s32.totalorder %s188, 2
          %s190 = scalar_select %p189, %s188, 2
          %s191 = smul.u32 128, %s190
          %p192 = scmp.lt.s32.totalorder %s187, 2
          %s193 = scalar_select %p192, %s187, 2
          %s194 = smul.addr %s193, 8
          %s195 = scalar_lea.vmem %s1, %s194
          %s196 = smul.u32 2, %s15
          %s197 = ssub.s32 3, %s196
          %p198 = scmp.lt.s32.totalorder %s197, 2
          %s199 = scalar_select %p198, %s197, 2
          %s200 = smul.u32 128, %s199
        $region32: #{tpu_custom_call.1} parent=27 // pred_fallthru
          _
        // Predicated region
        $region33: #{tpu_custom_call.1} parent=27 // pred_check
          %p201 = pneg %p82
        $region34: #{tpu_custom_call.1} parent=27 // pred_check_branch
          %203 = sbr.rel (%p201) target = $region36
        $region35: #{tpu_custom_call.1} parent=27 // pred_region
          %s204 = smul.u32 2, %s15
          %s205 = ssub.s32 3, %s204
          %p206 = scmp.lt.s32.totalorder %s205, 2
          %s207 = scalar_select %p206, %s205, 2
          %s208 = smul.u32 128, %s207
          %p209 = scmp.lt.s32.totalorder %s204, 2
          %s210 = scalar_select %p209, %s204, 2
          %s211 = smul.addr %s210, 8
          %s212 = scalar_lea.vmem %s2, %s211
          %s213 = smul.u32 2, %s15
          %s214 = ssub.s32 3, %s213
          %p215 = scmp.lt.s32.totalorder %s214, 2
          %s216 = scalar_select %p215, %s214, 2
          %s217 = smul.u32 128, %s216
        $region36: #{tpu_custom_call.1} parent=27 // pred_fallthru
          _
      $region28: #{tpu_custom_call.1} parent=5 // pred_fallthru
        _
      %p218 = scmp.le.s32.totalorder 1, %s15
      %p219 = scmp.lt.s32.totalorder %s15, 3
      %p220 = pnand %p218, %p219
      %p221 = pneg %p220
      // Predicated region
      $region37: #{tpu_custom_call.1} parent=5 // pred_check
        _
      $region38: #{tpu_custom_call.1} parent=5 // pred_check_branch
        %223 = sbr.rel (%p220) target = $region40
      $region39: #{tpu_custom_call.1} parent=5 // pred_region
        %s224 = ssub.s32 %s15, 1
        %p225 = pneg %p36
        %p226 = pneg %p33
        %s227 = smul.u32 2, %s20
        %s228 = ssub.s32 3, %s227
        %p229 = scmp.lt.s32.totalorder %s228, 2
        %s230 = scalar_select %p229, %s228, 2
        %s231 = smul.u32 128, %s230
        %p232 = scmp.lt.s32.totalorder %s227, 2
        %s233 = scalar_select %p232, %s227, 2
        %s234 = smul.addr %s233, 8
        %s235 = scalar_lea.vmem %s1, %s234
        %p236 = pneg %p62
        %p237 = pneg %p59
        %s238 = smul.u32 2, %s20
        %s239 = ssub.s32 3, %s238
        %p240 = scmp.lt.s32.totalorder %s239, 2
        %s241 = scalar_select %p240, %s239, 2
        %s242 = smul.u32 128, %s241
        %p243 = scmp.lt.s32.totalorder %s238, 2
        %s244 = scalar_select %p243, %s238, 2
        %s245 = smul.addr %s244, 8
        %s246 = scalar_lea.vmem %s2, %s245
        %p247 = pneg %p88
        %p248 = pneg %p85
        %p249 = pneg %p109
        %p250 = pneg %p106
        %p251 = pneg %p130
        %p252 = pneg %p127
        %p253 = pneg %p156
        %p254 = pneg %p153
        %s255 = sand.u32 %s143, 1
        %s256 = scalar_lea.sflag [#allocation4], %s255
        %s257 = sand.u32 %s143, 1
        %s258 = scalar_lea.vmem [#allocation3], %s257
        %s259 = smul.u32 2, %s20
        %s260 = ssub.s32 3, %s259
        %p261 = scmp.lt.s32.totalorder %s260, 2
        %s262 = scalar_select %p261, %s260, 2
        %s263 = smul.u32 128, %s262
        %p264 = scmp.lt.s32.totalorder %s259, 2
        %s265 = scalar_select %p264, %s259, 2
        %s266 = smul.addr %s265, 8
        %s267 = scalar_lea.vmem %s1, %s266
        %s268 = smul.u32 2, %s20
        %s269 = ssub.s32 3, %s268
        %p270 = scmp.lt.s32.totalorder %s269, 2
        %s271 = scalar_select %p270, %s269, 2
        %s272 = smul.u32 128, %s271
        %s273 = smul.u32 2, %s20
        %s274 = ssub.s32 3, %s273
        %p275 = scmp.lt.s32.totalorder %s274, 2
        %s276 = scalar_select %p275, %s274, 2
        %s277 = smul.u32 128, %s276
        %p278 = scmp.lt.s32.totalorder %s273, 2
        %s279 = scalar_select %p278, %s273, 2
        %s280 = smul.addr %s279, 8
        %s281 = scalar_lea.vmem %s2, %s280
        %s282 = smul.u32 2, %s20
        %s283 = ssub.s32 3, %s282
        %p284 = scmp.lt.s32.totalorder %s283, 2
        %s285 = scalar_select %p284, %s283, 2
        %s286 = smul.u32 128, %s285
        %v287 = vld [vmem:[%s267] sm:$0xff]
        %v288 = vld [vmem:[%s267 + $0x8] sm:$0xff]
        %v289 = vld [vmem:[%s281] sm:$0xff]
        %v290 = vld [vmem:[%s281 + $0x8] sm:$0xff]
        %v291 = vld [vmem:[%s3] sm:$0xff]
        %v292 = vld [vmem:[%s3 + $0x8] sm:$0x1]
        %v293 = vld [vmem:[%s4] sm:$0xff]
        %v294 = vld [vmem:[%s4 + $0x8] sm:$0x1]
        %vm295 = vcmask 130048
        %v297 = vsel %vm295, %v293, 0
        %v300 = vsel %vm295, %v294, 0
        %v303 = vsel %vm295, %v289, 0
        %v306 = vsel %vm295, %v290, 0
        %308 = vmatprep.subr.mxu0 0.0
        %309 = vmatpush1.xpose.msra.mxu0 0.0
        %310 = vmatprep.subr.mxu0 0.0
        %311 = vmatpush1.xpose.msra.mxu0 0.0
        %312 = vmatprep.subr.mxu0 0.0
        %313 = vmatpush1.xpose.msra.mxu0 0.0
        %314 = vmatprep.subr.mxu0 0.0
        %315 = vmatpush1.xpose.msra.mxu0 0.0
        %316 = vmatprep.subr.mxu0 0.0
        %317 = vmatpush1.xpose.msra.mxu0 0.0
        %318 = vmatprep.subr.mxu0 0.0
        %319 = vmatpush1.xpose.msra.mxu0 0.0
        %320 = vmatprep.subr.mxu0 0.0
        %321 = vmatpush1.xpose.msra.mxu0 0.0
        %322 = vmatprep.subr.mxu0 0.0
        %323 = vmatpush1.xpose.msra.mxu0 0.0
        %324 = vmatprep.subr.mxu0 0.0
        %325 = vmatpush1.xpose.msra.mxu0 0.0
        %326 = vmatprep.subr.mxu0 0.0
        %327 = vmatpush1.xpose.msra.mxu0 0.0
        %328 = vmatprep.subr.mxu0 0.0
        %329 = vmatpush1.xpose.msra.mxu0 0.0
        %330 = vmatprep.subr.mxu0 0.0
        %331 = vmatpush1.xpose.msra.mxu0 0.0
        %332 = vmatprep.subr.mxu0 0.0
        %333 = vmatpush1.xpose.msra.mxu0 0.0
        %334 = vmatprep.subr.mxu0 0.0
        %335 = vmatpush1.xpose.msra.mxu0 0.0
        %336 = vmatprep.subr.mxu0 0.0
        %337 = vmatpush1.xpose.msra.mxu0 %v306
        %338 = vmatprep.subr.mxu0 0.0
        %339 = vmatpush1.xpose.msra.mxu0 %v303
        %340 = vmatprep.subr.mxu0 0.0
        %341 = vmatpush2.xpose.msra.mxu0 0.0
        %342 = vmatprep.subr.mxu0 0.0
        %343 = vmatpush2.xpose.msra.mxu0 0.0
        %344 = vmatprep.subr.mxu0 0.0
        %345 = vmatpush2.xpose.msra.mxu0 0.0
        %346 = vmatprep.subr.mxu0 0.0
        %347 = vmatpush2.xpose.msra.mxu0 0.0
        %348 = vmatprep.subr.mxu0 0.0
        %349 = vmatpush2.xpose.msra.mxu0 0.0
        %350 = vmatprep.subr.mxu0 0.0
        %351 = vmatpush2.xpose.msra.mxu0 0.0
        %352 = vmatprep.subr.mxu0 0.0
        %353 = vmatpush2.xpose.msra.mxu0 0.0
        %354 = vmatprep.subr.mxu0 0.0
        %355 = vmatpush2.xpose.msra.mxu0 0.0
        %356 = vmatprep.subr.mxu0 0.0
        %357 = vmatpush2.xpose.msra.mxu0 0.0
        %358 = vmatprep.subr.mxu0 0.0
        %359 = vmatpush2.xpose.msra.mxu0 0.0
        %360 = vmatprep.subr.mxu0 0.0
        %361 = vmatpush2.xpose.msra.mxu0 0.0
        %362 = vmatprep.subr.mxu0 0.0
        %363 = vmatpush2.xpose.msra.mxu0 0.0
        %364 = vmatprep.subr.mxu0 0.0
        %365 = vmatpush2.xpose.msra.mxu0 0.0
        %366 = vmatprep.subr.mxu0 0.0
        %367 = vmatpush2.xpose.msra.mxu0 0.0
        %368 = vmatprep.subr.mxu0 0.0
        %369 = vmatpush2.xpose.msra.mxu0 0.0
        %370 = vmatprep.subr.mxu0 0.0
        %371 = vmatpush2.xpose.msra.mxu0 0.0
        %372 = vmatprep.mubr.f32.mxu0 0.0
        %373 = vmatmul.mubr.f32.gmra.mxu0 %v297
        %v374 = vpop.f32.mrf.mxu0
        %v375 = vadd.f32 0.0, %v374
        %v376 = vpop.f32.mrf.mxu0
        %377 = vmatprep.mubr.f32.mxu0 0.0
        %378 = vmatmul.mubr.f32.gmra.mxu0 %v300
        %v379 = vpop.f32.mrf.mxu0
        %v380 = vadd.f32 0.0, %v379
        %v381 = vpop.f32.mrf.mxu0
        %382 = vdwg.mxu0
        %v384 = vsel %vm295, %v291, 0
        %v387 = vsel %vm295, %v292, 0
        %v390 = vsel %vm295, %v287, 0
        %v393 = vsel %vm295, %v288, 0
        %395 = vmatprep.subr.mxu0 0.0
        %396 = vmatpush1.xpose.msra.mxu0 0.0
        %397 = vmatprep.subr.mxu0 0.0
        %398 = vmatpush1.xpose.msra.mxu0 0.0
        %399 = vmatprep.subr.mxu0 0.0
        %400 = vmatpush1.xpose.msra.mxu0 0.0
        %401 = vmatprep.subr.mxu0 0.0
        %402 = vmatpush1.xpose.msra.mxu0 0.0
        %403 = vmatprep.subr.mxu0 0.0
        %404 = vmatpush1.xpose.msra.mxu0 0.0
        %405 = vmatprep.subr.mxu0 0.0
        %406 = vmatpush1.xpose.msra.mxu0 0.0
        %407 = vmatprep.subr.mxu0 0.0
        %408 = vmatpush1.xpose.msra.mxu0 0.0
        %409 = vmatprep.subr.mxu0 0.0
        %410 = vmatpush1.xpose.msra.mxu0 0.0
        %411 = vmatprep.subr.mxu0 0.0
        %412 = vmatpush1.xpose.msra.mxu0 0.0
        %413 = vmatprep.subr.mxu0 0.0
        %414 = vmatpush1.xpose.msra.mxu0 0.0
        %415 = vmatprep.subr.mxu0 0.0
        %416 = vmatpush1.xpose.msra.mxu0 0.0
        %417 = vmatprep.subr.mxu0 0.0
        %418 = vmatpush1.xpose.msra.mxu0 0.0
        %419 = vmatprep.subr.mxu0 0.0
        %420 = vmatpush1.xpose.msra.mxu0 0.0
        %421 = vmatprep.subr.mxu0 0.0
        %422 = vmatpush1.xpose.msra.mxu0 0.0
        %423 = vmatprep.subr.mxu0 0.0
        %424 = vmatpush1.xpose.msra.mxu0 %v393
        %425 = vmatprep.subr.mxu0 0.0
        %426 = vmatpush1.xpose.msra.mxu0 %v390
        %427 = vmatprep.subr.mxu0 0.0
        %428 = vmatpush2.xpose.msra.mxu0 0.0
        %429 = vmatprep.subr.mxu0 0.0
        %430 = vmatpush2.xpose.msra.mxu0 0.0
        %431 = vmatprep.subr.mxu0 0.0
        %432 = vmatpush2.xpose.msra.mxu0 0.0
        %433 = vmatprep.subr.mxu0 0.0
        %434 = vmatpush2.xpose.msra.mxu0 0.0
        %435 = vmatprep.subr.mxu0 0.0
        %436 = vmatpush2.xpose.msra.mxu0 0.0
        %437 = vmatprep.subr.mxu0 0.0
        %438 = vmatpush2.xpose.msra.mxu0 0.0
        %439 = vmatprep.subr.mxu0 0.0
        %440 = vmatpush2.xpose.msra.mxu0 0.0
        %441 = vmatprep.subr.mxu0 0.0
        %442 = vmatpush2.xpose.msra.mxu0 0.0
        %443 = vmatprep.subr.mxu0 0.0
        %444 = vmatpush2.xpose.msra.mxu0 0.0
        %445 = vmatprep.subr.mxu0 0.0
        %446 = vmatpush2.xpose.msra.mxu0 0.0
        %447 = vmatprep.subr.mxu0 0.0
        %448 = vmatpush2.xpose.msra.mxu0 0.0
        %449 = vmatprep.subr.mxu0 0.0
        %450 = vmatpush2.xpose.msra.mxu0 0.0
        %451 = vmatprep.subr.mxu0 0.0
        %452 = vmatpush2.xpose.msra.mxu0 0.0
        %453 = vmatprep.subr.mxu0 0.0
        %454 = vmatpush2.xpose.msra.mxu0 0.0
        %455 = vmatprep.subr.mxu0 0.0
        %456 = vmatpush2.xpose.msra.mxu0 0.0
        %457 = vmatprep.subr.mxu0 0.0
        %458 = vmatpush2.xpose.msra.mxu0 0.0
        %459 = vmatprep.mubr.f32.mxu0 0.0
        %460 = vmatmul.mubr.f32.gmra.mxu0 %v384
        %v461 = vpop.f32.mrf.mxu0
        %v462 = vadd.f32 %v375, %v461
        %v463 = vpop.f32.mrf.mxu0
        %464 = vmatprep.mubr.f32.mxu0 0.0
        %465 = vmatmul.mubr.f32.gmra.mxu0 %v387
        %v466 = vpop.f32.mrf.mxu0
        %v467 = vadd.f32 %v380, %v466
        %v468 = vpop.f32.mrf.mxu0
        %469 = vdwg.mxu0
        %v470 = vmul.f32 %v462, %v462
        %v471 = vsel %vm295, %v470, 0.0
        %v472 = vrot.slane %v471, 4
        %v473 = vadd.f32 %v471, %v472
        %v474 = vrot.slane %v473, 2
        %v475 = vadd.f32 %v473, %v474
        %v476 = vrot.slane %v475, 1
        %v477 = vadd.f32 %v475, %v476
        %s478 = sld [smem:[#allocation2]]
        %v479 = vstv %s478
        %v480 = vadd.f32 %v467, %v479
        %v481 = vadd.f32 %v480, %v477
        %vm482 = vcmask 122880
        %483 = vst.msk [vmem:[%s258] sm:$0x1] %vm482, %v481
        %s484 = sand.u32 %s143, 1
        %s485 = scalar_lea.sflag [#allocation4], %s484
        %s486 = sand.u32 %s143, 1
        %s487 = scalar_lea.vmem [#allocation3], %s486
        // Predicated region
        $region41: #{tpu_custom_call.1} parent=39 // pred_check
          %p488 = pneg %p153
        $region42: #{tpu_custom_call.1} parent=39 // pred_check_branch
          %490 = sbr.rel (%p488) target = $region44
        $region43: #{tpu_custom_call.1} parent=39 // pred_region
          %s492 = ssub.s32 16, 16
          %493 = vsyncadd %s485, %s492
          %s494 = smul.addr %s20, 16
          %s495 = scalar_lea.hbm %s5, %s494
          %s497 = sshll.u32 %s487, 4
          %s498 = int_to_ptr.vmem [resolvable:$true] %s497
          %500 = dma.vmem_to_hbm [thread:$0]  %s498, 16, %s495, %s485
        $region44: #{tpu_custom_call.1} parent=39 // pred_fallthru
          _
      $region40: #{tpu_custom_call.1} parent=5 // pred_fallthru
        _
      %p501 = scmp.le.s32.totalorder 2, %s15
      // Predicated region
      $region45: #{tpu_custom_call.1} parent=5 // pred_check
        %p502 = pneg %p501
      $region46: #{tpu_custom_call.1} parent=5 // pred_check_branch
        %504 = sbr.rel (%p502) target = $region48
      $region47: #{tpu_custom_call.1} parent=5 // pred_region
        %s505 = ssub.s32 %s15, 2
        // Predicated region
        $region49: #{tpu_custom_call.1} parent=47 // pred_check
          %p506 = pneg %p159
        $region50: #{tpu_custom_call.1} parent=47 // pred_check_branch
          %508 = sbr.rel (%p506) target = $region52
        $region51: #{tpu_custom_call.1} parent=47 // pred_region
          %s509 = sand.u32 %s144, 1
          %s510 = scalar_lea.sflag [#allocation4], %s509
          %s511 = sand.u32 %s144, 1
          %s512 = scalar_lea.vmem [#allocation3], %s511
          %513 = dma.done %s510, 16
        $region52: #{tpu_custom_call.1} parent=47 // pred_fallthru
          _
      $region48: #{tpu_custom_call.1} parent=5 // pred_fallthru
        _
    $region6: #{tpu_custom_call.1} parent=1 // loop_footer
      %s19 = sadd.s32 1, %s15
    $region7: #{tpu_custom_call.1} parent=1 // loop_footer_branch
      %14 = sbr.rel target = $region3
    $region8: #{tpu_custom_call.1} parent=1 // loop_exit
      _
    %514 = vsyncpa [#allocation4], 1
    %s515 = scalar_lea.sflag [#allocation4], 1
    %516 = vsyncpa %s515, 1

</llo_original>
